<compile_context>
chip_gen: v7x
topology: tpu7x:2x2x1
jax: 0.10.0
libtpu: 0.0.40
codegen_flags: <defaults>
</compile_context>

<pallas_src>
import numpy as np
import jax
import jax.numpy as jnp
from jax.experimental import pallas as pl
from jax.experimental.pallas import tpu as pltpu

LANE = 128
SUBLANE = 8
NEG_INF = -1e30
T_CHUNK = 8          # timesteps per grid step (amortizes per-grid-step overhead)


def _ru(x, m):
    return (x + m - 1) // m * m


def _pad_to(x, shape):
    return jnp.pad(x, [(0, s - d) for s, d in zip(shape, x.shape)])


def _regate(w, R, RP, ngates):
    # (in, ngates*R) -> (in, ngates*RP): each gate moves to its own lane-aligned block.
    blocks = [jnp.pad(w[:, g * R:(g + 1) * R], ((0, 0), (0, RP - R)))
              for g in range(ngates)]
    return jnp.concatenate(blocks, axis=1)


def _nbytes(a):
    return int(a.size) * a.dtype.itemsize


# ---------------------------------------------------------------------------
# Kernel 1: att_embed (Linear + ReLU) fused with ctx2att (Linear), row-tiled.
# ---------------------------------------------------------------------------
def att_embed_kernel(x_ref, wa_ref, ba_ref, wc_ref, bc_ref, emb_ref, ctx_ref):
    emb = jnp.maximum(
        jnp.dot(x_ref[...], wa_ref[...], preferred_element_type=jnp.float32)
        + ba_ref[...], 0.0)
    emb_ref[...] = emb
    ctx_ref[...] = (
        jnp.dot(emb, wc_ref[...], preferred_element_type=jnp.float32) + bc_ref[...])


def att_embed_call(x_flat, wa, ba, wc, bc, tile_rows):
    n_pad, FP = x_flat.shape
    RP = wa.shape[1]
    HP = wc.shape[1]
    est = (2 * 4 * (tile_rows * FP + tile_rows * RP + tile_rows * HP)
           + 2 * (_nbytes(wa) + _nbytes(ba) + _nbytes(wc) + _nbytes(bc))
           + (2 << 20))
    return pl.pallas_call(
        att_embed_kernel,
        out_shape=(jax.ShapeDtypeStruct((n_pad, RP), jnp.float32),
                   jax.ShapeDtypeStruct((n_pad, HP), jnp.float32)),
        grid=(n_pad // tile_rows,),
        in_specs=[pl.BlockSpec((tile_rows, FP), lambda i: (i, 0)),
                  pl.BlockSpec((FP, RP), lambda i: (0, 0)),
                  pl.BlockSpec((1, RP), lambda i: (0, 0)),
                  pl.BlockSpec((RP, HP), lambda i: (0, 0)),
                  pl.BlockSpec((1, HP), lambda i: (0, 0))],
        out_specs=(pl.BlockSpec((tile_rows, RP), lambda i: (i, 0)),
                   pl.BlockSpec((tile_rows, HP), lambda i: (i, 0))),
        compiler_params=pltpu.CompilerParams(
            dimension_semantics=("parallel",),
            vmem_limit_bytes=min(max(int(est), 16 << 20), 112 << 20)),
    )(x_flat, wa, ba, wc, bc)


# ---------------------------------------------------------------------------
# Kernel 2: the whole caption recurrence, chunked over timesteps.
#   per step: embedding row gather + ReLU, BaseAttention, maxout attention-LSTM,
#   logit + log_softmax.  h/c carried in VMEM scratch, weights VMEM-resident.
# ---------------------------------------------------------------------------
def seq_kernel(caps_ref,                          # SMEM (T_pad*BP,) int32 (scalar prefetch)
               embed_ref, attv_ref, patt_ref,     # VMEM-resident table / activations
               wbig_ref, bbig_ref, wal_ref,
               wa2c_ref, ba2c_ref, wl_ref, bl_ref,
               lp_ref,                            # out block (T_CHUNK, BP, VP)
               h_ref, c_ref):                     # VMEM scratch: recurrent state
    t = pl.program_id(0)
    BP, RP = h_ref.shape
    HP = wal_ref.shape[1]
    n_steps = lp_ref.shape[0]

    @pl.when(t == 0)
    def _():
        h_ref[...] = jnp.zeros_like(h_ref)
        c_ref[...] = jnp.zeros_like(c_ref)

    def step(i, carry):
        # --- word_embed: direct row gather (Embedding) + ReLU (Dropout identity) ---
        base = (t * n_steps + i) * BP
        rows = [embed_ref[pl.ds(caps_ref[base + b], 1), :] for b in range(BP)]
        xt = jnp.maximum(jnp.concatenate(rows, axis=0), 0.0)          # (BP, EP)

        h = h_ref[...]
        c = c_ref[...]

        # --- fused [xt|h] @ [i2h;h2h | 0;h2att]: 5 gates + att_h in one MXU pass ---
        xh = jnp.concatenate([xt, h], axis=1)                         # (BP, EP+RP)
        allp = (jnp.dot(xh, wbig_ref[...], preferred_element_type=jnp.float32)
                + bbig_ref[...])                                      # (BP, 5*RP+HP)

        # --- BaseAttention (alpha_net bias dropped: softmax shift-invariant) ---
        att_h = allp[:, 5 * RP:5 * RP + HP]                           # (BP, HP)
        dot = jnp.tanh(patt_ref[...] + att_h[:, None, :])             # (BP, A, HP)
        scores = jnp.sum(dot * wal_ref[...][None, :, :], axis=-1)     # (BP, A)
        # NOTE: A (attention regions) is never padded here; if it were, padded scores
        # would need a -inf mask before the softmax.
        scores = scores - jnp.max(scores, axis=-1, keepdims=True)
        e = jnp.exp(scores)
        wgt = e / jnp.sum(e, axis=-1, keepdims=True)
        att_res = jnp.sum(wgt[:, :, None] * attv_ref[...], axis=1)    # (BP, RP)

        # --- maxout attention-LSTM (gates lane-aligned at RP blocks) ---
        in_g = jax.nn.sigmoid(allp[:, 0 * RP:1 * RP])
        f_g = jax.nn.sigmoid(allp[:, 1 * RP:2 * RP])
        o_g = jax.nn.sigmoid(allp[:, 2 * RP:3 * RP])
        a2c = (jnp.dot(att_res, wa2c_ref[...], preferred_element_type=jnp.float32)
               + ba2c_ref[...])                                       # (BP, 2*RP)
        it_ = allp[:, 3 * RP:5 * RP] + a2c
        it_max = jnp.maximum(it_[:, :RP], it_[:, RP:])
        next_c = f_g * c + in_g * it_max
        next_h = o_g * jnp.tanh(next_c)
        h_ref[...] = next_h
        c_ref[...] = next_c

        # --- logit + log_softmax (padded vocab lanes biased to -1e30) ---
        logits = (jnp.dot(next_h, wl_ref[...], preferred_element_type=jnp.float32)
                  + bl_ref[...])
        z = logits - jnp.max(logits, axis=-1, keepdims=True)
        lp_ref[i] = z - jnp.log(jnp.sum(jnp.exp(z), axis=-1, keepdims=True))
        return carry

    jax.lax.fori_loop(0, n_steps, step, 0, unroll=True)


def seq_call(caps_flat, att_v, p_att, pp, n_chunks):
    BP, A, RP = att_v.shape
    HP = p_att.shape[2]
    VP = pp['w_logit'].shape[1]

    c2 = lambda t, caps: (0, 0)
    c3 = lambda t, caps: (0, 0, 0)

    weights = [pp['embed'], pp['w_big'], pp['b_big'], pp['w_alpha'],
               pp['w_a2c'], pp['b_a2c'], pp['w_logit'], pp['b_logit']]
    in_bytes = sum(_nbytes(a) for a in weights) + _nbytes(att_v) + _nbytes(p_att)
    out_bytes = T_CHUNK * BP * VP * 4
    scratch_bytes = 2 * BP * RP * 4
    # NOTE: Pallas double-buffers blocked operands by default; the constant-index
    # weights only DMA once, so pipeline_mode=pl.Buffered(1) would halve their
    # footprint — left at the default here for maximum compiler compatibility and
    # the ×2 is accounted for in the explicit vmem_limit_bytes instead.
    est = 2 * (in_bytes + out_bytes) + scratch_bytes + (2 << 20)

    grid_spec = pltpu.PrefetchScalarGridSpec(
        num_scalar_prefetch=1,
        grid=(n_chunks,),
        in_specs=[
            pl.BlockSpec(pp['embed'].shape, c2),
            pl.BlockSpec((BP, A, RP), c3),
            pl.BlockSpec((BP, A, HP), c3),
            pl.BlockSpec(pp['w_big'].shape, c2),
            pl.BlockSpec(pp['b_big'].shape, c2),
            pl.BlockSpec(pp['w_alpha'].shape, c2),
            pl.BlockSpec(pp['w_a2c'].shape, c2),
            pl.BlockSpec(pp['b_a2c'].shape, c2),
            pl.BlockSpec(pp['w_logit'].shape, c2),
            pl.BlockSpec(pp['b_logit'].shape, c2),
        ],
        out_specs=pl.BlockSpec((T_CHUNK, BP, VP), lambda t, caps: (t, 0, 0)),
        scratch_shapes=[pltpu.VMEM((BP, RP), jnp.float32),
                        pltpu.VMEM((BP, RP), jnp.float32)],
    )
    return pl.pallas_call(
        seq_kernel,
        out_shape=jax.ShapeDtypeStruct((n_chunks * T_CHUNK, BP, VP), jnp.float32),
        grid_spec=grid_spec,
        compiler_params=pltpu.CompilerParams(
            dimension_semantics=("arbitrary",),
            vmem_limit_bytes=min(max(int(est), 16 << 20), 112 << 20)),
    )(caps_flat, pp['embed'], att_v, p_att,
      pp['w_big'], pp['b_big'], pp['w_alpha'],
      pp['w_a2c'], pp['b_a2c'], pp['w_logit'], pp['b_logit'])


# ---------------------------------------------------------------------------
# Parameter init (deterministic, synthetic weights; nn.Linear stored as (in, out))
# ---------------------------------------------------------------------------
def init_params(key, vocab_size, E, R, F, H):
    ks = jax.random.split(key, 10)

    def lin(k, i, o, scale=0.05):
        kw, kb = jax.random.split(k)
        return (scale * jax.random.normal(kw, (i, o), jnp.float32),
                scale * jax.random.normal(kb, (1, o), jnp.float32))

    p = {}
    p['embed'] = 0.05 * jax.random.normal(ks[0], (vocab_size + 1, E), jnp.float32)
    p['w_att_embed'], p['b_att_embed'] = lin(ks[1], F, R)
    p['w_ctx2att'], p['b_ctx2att'] = lin(ks[2], R, H)
    p['w_h2att'], p['b_h2att'] = lin(ks[3], R, H)
    p['w_alpha'], p['b_alpha'] = lin(ks[4], H, 1)     # alpha_net: Linear(H, 1)
    p['w_i2h'], p['b_i2h'] = lin(ks[5], E, 5 * R)
    p['w_h2h'], p['b_h2h'] = lin(ks[6], R, 5 * R)
    p['w_a2c'], p['b_a2c'] = lin(ks[7], R, 2 * R)
    p['w_logit'], p['b_logit'] = lin(ks[8], R, vocab_size + 1)
    return p


def prepare_padded_params(p):
    V1, E = p['embed'].shape
    F, R = p['w_att_embed'].shape
    H = p['w_ctx2att'].shape[1]
    EP, FP, RP, HP = _ru(E, LANE), _ru(F, LANE), _ru(R, LANE), _ru(H, LANE)
    V1P = _ru(V1, LANE)
    VP = V1P

    pp = {'dims': dict(E=E, F=F, R=R, H=H, V1=V1, EP=EP, FP=FP, RP=RP, HP=HP, VP=VP)}
    pp['embed'] = _pad_to(p['embed'], (V1P, EP))
    pp['w_att_embed'] = _pad_to(p['w_att_embed'], (FP, RP))
    pp['b_att_embed'] = _pad_to(p['b_att_embed'], (1, RP))
    pp['w_ctx2att'] = _pad_to(p['w_ctx2att'], (RP, HP))
    pp['b_ctx2att'] = _pad_to(p['b_ctx2att'], (1, HP))
    pp['w_alpha'] = _pad_to(p['w_alpha'].T, (1, HP))   # alpha_net bias dropped (exact)

    # Fused [xt | h] projection: 5 lane-aligned maxout-LSTM gate blocks + the h2att
    # attention projection as extra output columns (zero rows over the xt half).
    w_i2h_g = _pad_to(_regate(p['w_i2h'], R, RP, 5), (EP, 5 * RP))
    w_h2h_g = _pad_to(_regate(p['w_h2h'], R, RP, 5), (RP, 5 * RP))
    top = jnp.concatenate([w_i2h_g, jnp.zeros((EP, HP), jnp.float32)], axis=1)
    bot = jnp.concatenate([w_h2h_g, _pad_to(p['w_h2att'], (RP, HP))], axis=1)
    pp['w_big'] = jnp.concatenate([top, bot], axis=0)                 # (EP+RP, 5*RP+HP)
    b_gates = _regate(p['b_i2h'] + p['b_h2h'], R, RP, 5)              # (1, 5*RP)
    pp['b_big'] = jnp.concatenate([b_gates, _pad_to(p['b_h2att'], (1, HP))], axis=1)

    pp['w_a2c'] = _pad_to(_regate(p['w_a2c'], R, RP, 2), (RP, 2 * RP))
    pp['b_a2c'] = _regate(p['b_a2c'], R, RP, 2)
    pp['w_logit'] = _pad_to(p['w_logit'], (RP, VP))
    if VP > V1:
        pp['b_logit'] = jnp.concatenate(
            [p['b_logit'], jnp.full((1, VP - V1), NEG_INF, jnp.float32)], axis=1)
    else:
        pp['b_logit'] = p['b_logit']
    return pp


# ---------------------------------------------------------------------------
# FinetuneModel.forward
# ---------------------------------------------------------------------------
def finetune_forward(params, fc_feats, att_feats, captions, stage_id=1):
    # Output path for stage_id in (1, 2): log_softmax(logit(core_output)) per step.
    del fc_feats, stage_id          # fc_embed is identity; fc_feats is unused by BaseCore

    B, A, F = att_feats.shape
    pp = prepare_padded_params(params)
    d = pp['dims']
    BP = _ru(B, SUBLANE)

    # Host-side run length replaces the per-step `captions[:, i].sum() == 0` break so the
    # whole recurrence is a single dispatch (requires concrete captions, as in reference).
    caps_np = np.asarray(captions)
    T = captions.shape[1]
    T_run = T - 1
    for i in range(1, T - 1):
        if int(caps_np[:, i].sum()) == 0:
            T_run = i
            break
    T_pad = _ru(T_run, T_CHUNK)
    n_chunks = T_pad // T_CHUNK

    # att_embed (Linear+ReLU) and ctx2att, row-tiled + lane/sublane padded.
    n = BP * A
    tile_rows = 512 if n >= 512 else n          # n is a multiple of 8 (BP is)
    n_pad = _ru(n, tile_rows)
    x = jnp.pad(att_feats.astype(jnp.float32),
                ((0, BP - B), (0, 0), (0, d['FP'] - F)))
    x_flat = x.reshape(n, d['FP'])
    if n_pad > n:
        x_flat = jnp.pad(x_flat, ((0, n_pad - n), (0, 0)))
    emb, ctx = att_embed_call(x_flat, pp['w_att_embed'], pp['b_att_embed'],
                              pp['w_ctx2att'], pp['b_ctx2att'], tile_rows)
    att_v = emb[:n].reshape(BP, A, d['RP'])     # att_embed(att_feats)
    p_att = ctx[:n].reshape(BP, A, d['HP'])     # ctx2att(...)  (internal_att_feats)

    # Flat 1-D SMEM caption buffer, time-major (padded steps/rows use word id 0).
    caps_tb = np.zeros((T_pad, BP), np.int32)
    caps_tb[:T_run, :B] = caps_np[:, :T_run].T
    caps_flat = jnp.asarray(caps_tb.reshape(-1))

    lp = seq_call(caps_flat, att_v, p_att, pp, n_chunks)          # (T_pad, BP, VP)
    return jnp.transpose(lp[:T_run, :B, :d['V1']], (1, 0, 2))     # (B, T_run, vocab+1)


if __name__ == "__main__":
    key = jax.random.PRNGKey(0)
    B, A = 2, 8
    R, H, E, F = 32, 32, 32, 64
    vocab_size = 40
    T = 6

    kp, kf, ka, kc = jax.random.split(key, 4)
    params = init_params(kp, vocab_size, E, R, F, H)
    fc_feats = jax.random.normal(kf, (B, F), jnp.float32)
    att_feats = jax.random.normal(ka, (B, A, F), jnp.float32)
    captions = jax.random.randint(kc, (B, T), 1, vocab_size + 1, dtype=jnp.int32)

    out = finetune_forward(params, fc_feats, att_feats, captions, stage_id=1)
    jax.block_until_ready(out)
    assert out.shape == (B, T - 1, vocab_size + 1), out.shape
    print("KERNEL_OK")
</pallas_src>

<mosaic_0001>
module attributes {stable_mosaic.version = 11 : i64} {
  func.func @att_embed_kernel(%arg0: i32, %arg1: memref<64x128xf32, #tpu.memory_space<vmem>>, %arg2: memref<128x128xf32, #tpu.memory_space<vmem>>, %arg3: memref<1x128xf32, #tpu.memory_space<vmem>>, %arg4: memref<128x128xf32, #tpu.memory_space<vmem>>, %arg5: memref<1x128xf32, #tpu.memory_space<vmem>>, %arg6: memref<64x128xf32, #tpu.memory_space<vmem>>, %arg7: memref<64x128xf32, #tpu.memory_space<vmem>>) attributes {dimension_semantics = [#tpu.dimension_semantics<parallel>], iteration_bounds = array<i64: 1>, scalar_prefetch = 0 : i64, scratch_operands = 0 : i64, tpu.core_type = #tpu.core_type<tc>, window_params = [{transform_indices = @transform_0, window_bounds = array<i64: 64, 128>}, {pipeline_mode = #tpu.pipeline_mode<synchronous>, transform_indices = @transform_1, window_bounds = array<i64: 128, 128>}, {pipeline_mode = #tpu.pipeline_mode<synchronous>, transform_indices = @transform_2, window_bounds = array<i64: 1, 128>}, {pipeline_mode = #tpu.pipeline_mode<synchronous>, transform_indices = @transform_3, window_bounds = array<i64: 128, 128>}, {pipeline_mode = #tpu.pipeline_mode<synchronous>, transform_indices = @transform_4, window_bounds = array<i64: 1, 128>}, {transform_indices = @transform_5, window_bounds = array<i64: 64, 128>}, {transform_indices = @transform_6, window_bounds = array<i64: 64, 128>}]} {
    %c0 = arith.constant 0 : index
    %c0_0 = arith.constant 0 : index
    %0 = vector.load %arg1[%c0, %c0_0] : memref<64x128xf32, #tpu.memory_space<vmem>>, vector<64x128xf32>
    %c0_1 = arith.constant 0 : index
    %c0_2 = arith.constant 0 : index
    %1 = vector.load %arg2[%c0_1, %c0_2] : memref<128x128xf32, #tpu.memory_space<vmem>>, vector<128x128xf32>
    %cst = arith.constant dense<0.000000e+00> : vector<64x128xf32>
    %2 = tpu.matmul %0, %1, %cst {dimension_numbers = #tpu.dot_dimension_numbers<[1], [0], [0], [1], [0, 0, 1, 1], [], []>} : vector<64x128xf32>, vector<128x128xf32>, vector<64x128xf32> -> vector<64x128xf32>
    %c0_3 = arith.constant 0 : index
    %c0_4 = arith.constant 0 : index
    %3 = vector.load %arg3[%c0_3, %c0_4] : memref<1x128xf32, #tpu.memory_space<vmem>>, vector<1x128xf32>
    %4 = vector.broadcast %3 : vector<1x128xf32> to vector<64x128xf32>
    %5 = arith.addf %2, %4 : vector<64x128xf32>
    %cst_5 = arith.constant 0.000000e+00 : f32
    %6 = vector.broadcast %cst_5 : f32 to vector<64x128xf32>
    %7 = arith.maximumf %5, %6 : vector<64x128xf32>
    %c0_6 = arith.constant 0 : index
    %c0_7 = arith.constant 0 : index
    %8 = vector.load %arg6[%c0_6, %c0_7] : memref<64x128xf32, #tpu.memory_space<vmem>>, vector<64x128xf32>
    tpu.vector_store %arg6[%c0_6, %c0_7], %7 {strides = array<i32>} : memref<64x128xf32, #tpu.memory_space<vmem>>, vector<64x128xf32>,
    %c0_8 = arith.constant 0 : index
    %c0_9 = arith.constant 0 : index
    %9 = vector.load %arg4[%c0_8, %c0_9] : memref<128x128xf32, #tpu.memory_space<vmem>>, vector<128x128xf32>
    %cst_10 = arith.constant dense<0.000000e+00> : vector<64x128xf32>
    %10 = tpu.matmul %7, %9, %cst_10 {dimension_numbers = #tpu.dot_dimension_numbers<[1], [0], [0], [1], [0, 0, 1, 1], [], []>} : vector<64x128xf32>, vector<128x128xf32>, vector<64x128xf32> -> vector<64x128xf32>
    %c0_11 = arith.constant 0 : index
    %c0_12 = arith.constant 0 : index
    %11 = vector.load %arg5[%c0_11, %c0_12] : memref<1x128xf32, #tpu.memory_space<vmem>>, vector<1x128xf32>
    %12 = vector.broadcast %11 : vector<1x128xf32> to vector<64x128xf32>
    %13 = arith.addf %10, %12 : vector<64x128xf32>
    %c0_13 = arith.constant 0 : index
    %c0_14 = arith.constant 0 : index
    %14 = vector.load %arg7[%c0_13, %c0_14] : memref<64x128xf32, #tpu.memory_space<vmem>>, vector<64x128xf32>
    tpu.vector_store %arg7[%c0_13, %c0_14], %13 {strides = array<i32>} : memref<64x128xf32, #tpu.memory_space<vmem>>, vector<64x128xf32>,
    return
  }
  func.func @transform_0(%arg0: i32) -> (i32, i32) {
    %c0_i32 = arith.constant 0 : i32
    %c0_i32_0 = arith.constant 0 : i32
    return %arg0, %c0_i32 : i32, i32
  }
  func.func @transform_1(%arg0: i32) -> (i32, i32) {
    %c0_i32 = arith.constant 0 : i32
    %c0_i32_0 = arith.constant 0 : i32
    %c0_i32_1 = arith.constant 0 : i32
    return %c0_i32, %c0_i32_0 : i32, i32
  }
  func.func @transform_2(%arg0: i32) -> (i32, i32) {
    %c0_i32 = arith.constant 0 : i32
    %c0_i32_0 = arith.constant 0 : i32
    %c0_i32_1 = arith.constant 0 : i32
    return %c0_i32, %c0_i32_0 : i32, i32
  }
  func.func @transform_3(%arg0: i32) -> (i32, i32) {
    %c0_i32 = arith.constant 0 : i32
    %c0_i32_0 = arith.constant 0 : i32
    %c0_i32_1 = arith.constant 0 : i32
    return %c0_i32, %c0_i32_0 : i32, i32
  }
  func.func @transform_4(%arg0: i32) -> (i32, i32) {
    %c0_i32 = arith.constant 0 : i32
    %c0_i32_0 = arith.constant 0 : i32
    %c0_i32_1 = arith.constant 0 : i32
    return %c0_i32, %c0_i32_0 : i32, i32
  }
  func.func @transform_5(%arg0: i32) -> (i32, i32) {
    %c0_i32 = arith.constant 0 : i32
    %c0_i32_0 = arith.constant 0 : i32
    return %arg0, %c0_i32 : i32, i32
  }
  func.func @transform_6(%arg0: i32) -> (i32, i32) {
    %c0_i32 = arith.constant 0 : i32
    %c0_i32_0 = arith.constant 0 : i32
    return %arg0, %c0_i32 : i32, i32
  }
}

</mosaic_0001>

<llo_original>
// kernel: tpu_custom_call.1
$region0: #{tpu_custom_call.1}
  #allocation0 [shape = 'u32[]', space=smem, size = 0x4, offset = 0x4, fixed_abs, tag = 'smem constant byte address 0x4 - core index']
  #allocation1 [shape = 'u32[144,128]{1,0:T(1,128)}', space=vmem, size = 0x12000, scoped, tag = 'internal scratch']
  %s0 = inlined_call_operand.hbm [shape: f32[64,128], index: 0, kind: input, shape index: {}]
  %s1 = inlined_call_operand.hbm [shape: f32[128,128], index: 1, kind: input, shape index: {}]
  %s2 = inlined_call_operand.vmem [shape: f32[1,128], index: 2, kind: input, shape index: {}]
  %s3 = inlined_call_operand.hbm [shape: f32[128,128], index: 3, kind: input, shape index: {}]
  %s4 = inlined_call_operand.vmem [shape: f32[1,128], index: 4, kind: input, shape index: {}]
  %s5 = inlined_call_operand.hbm [shape: f32[64,128], index: 5, kind: output, shape index: {0}]
  %s6 = inlined_call_operand.hbm [shape: f32[64,128], index: 6, kind: output, shape index: {1}]
  %7 = xla_tuple %s5, %s6
  %s8 = sld [smem:[#allocation0]]
  $region50: #{tpu_custom_call.1} parent=0
    _
  %s10 = ssub.s32 1, %s8
  %s11 = scalar_select 0, %s10, %s8
  $region1: #{tpu_custom_call.1} parent=0
    #allocation2 [shape = 'u8[32768]{0}', space=vmem, size = 0x8000, scoped, tag = 'input window, operand 0, single buffered']
    #allocation3 [shape = 's32[1]{0}', space=sflag, size = 0x4, scoped, tag = 'scoped memory for tpu_custom_call.1']
    #allocation4 [shape = 's32[1]{0}', space=sflag, size = 0x4, scoped, tag = 'scoped memory for tpu_custom_call.1']
    #allocation5 [shape = 'u8[65536]{0}', space=vmem, size = 0x10000, scoped, tag = 'input window, operand 1, single buffered']
    #allocation6 [shape = 's32[1]{0}', space=sflag, size = 0x4, scoped, tag = 'scoped memory for tpu_custom_call.1']
    #allocation7 [shape = 'u8[65536]{0}', space=vmem, size = 0x10000, scoped, tag = 'input window, operand 3, single buffered']
    #allocation8 [shape = 'u8[32768]{0}', space=vmem, size = 0x8000, scoped, tag = 'output window, operand 0, single buffered']
    #allocation9 [shape = 'u8[32768]{0}', space=vmem, size = 0x8000, scoped, tag = 'output window, operand 1, single buffered']
    #allocation10 [shape = 's32[1]{0}', space=sflag, size = 0x4, scoped, tag = 'scoped memory for tpu_custom_call.1']
    %12 = vsyncpa [#allocation3], 0
    %13 = vsyncpa [#allocation6], 0
    %14 = vsyncpa [#allocation4], 0
    %15 = vsyncpa [#allocation10], 0
    // Predicated region
    $region2: #{tpu_custom_call.1} parent=1 // pred_check
      _
    $region3: #{tpu_custom_call.1} parent=1 // pred_check_branch
      %17 = sbr.rel (0) target = $region5
    $region4: #{tpu_custom_call.1} parent=1 // pred_region
      %s19 = ssub.s32 1024, 1024
      %20 = vsyncadd [#allocation3], %s19
      %s21 = sshll.u32 [#allocation2], 4
      %s22 = int_to_ptr.vmem [resolvable:$true] %s21
      %27 = dma.hbm_to_vmem [thread:$0]  %s0, 1024, %s22, [#allocation3], 128, 128, 8
    $region5: #{tpu_custom_call.1} parent=1 // pred_fallthru
      _
    // Predicated region
    $region6: #{tpu_custom_call.1} parent=1 // pred_check
      _
    $region7: #{tpu_custom_call.1} parent=1 // pred_check_branch
      %29 = sbr.rel (0) target = $region9
    $region8: #{tpu_custom_call.1} parent=1 // pred_region
      %s31 = ssub.s32 2048, 2048
      %32 = vsyncadd [#allocation6], %s31
      %s33 = sshll.u32 [#allocation5], 4
      %s34 = int_to_ptr.vmem [resolvable:$true] %s33
      %39 = dma.hbm_to_vmem [thread:$0]  %s1, 2048, %s34, [#allocation6], 128, 128, 8
    $region9: #{tpu_custom_call.1} parent=1 // pred_fallthru
      _
    // Predicated region
    $region10: #{tpu_custom_call.1} parent=1 // pred_check
      _
    $region11: #{tpu_custom_call.1} parent=1 // pred_check_branch
      %41 = sbr.rel (0) target = $region13
    $region12: #{tpu_custom_call.1} parent=1 // pred_region
      _
    $region13: #{tpu_custom_call.1} parent=1 // pred_fallthru
      _
    // Predicated region
    $region14: #{tpu_custom_call.1} parent=1 // pred_check
      _
    $region15: #{tpu_custom_call.1} parent=1 // pred_check_branch
      %43 = sbr.rel (0) target = $region17
    $region16: #{tpu_custom_call.1} parent=1 // pred_region
      %s45 = ssub.s32 2048, 2048
      %46 = vsyncadd [#allocation6], %s45
      %s47 = sshll.u32 [#allocation7], 4
      %s48 = int_to_ptr.vmem [resolvable:$true] %s47
      %53 = dma.hbm_to_vmem [thread:$0]  %s3, 2048, %s48, [#allocation6], 128, 128, 8
    $region17: #{tpu_custom_call.1} parent=1 // pred_fallthru
      _
    // Predicated region
    $region18: #{tpu_custom_call.1} parent=1 // pred_check
      _
    $region19: #{tpu_custom_call.1} parent=1 // pred_check_branch
      %55 = sbr.rel (0) target = $region21
    $region20: #{tpu_custom_call.1} parent=1 // pred_region
      _
    $region21: #{tpu_custom_call.1} parent=1 // pred_fallthru
      _
    // Predicated region
    $region22: #{tpu_custom_call.1} parent=1 // pred_check
      _
    $region23: #{tpu_custom_call.1} parent=1 // pred_check_branch
      %57 = sbr.rel (0) target = $region25
    $region24: #{tpu_custom_call.1} parent=1 // pred_region
      %58 = dma.done [#allocation3], 1024
    $region25: #{tpu_custom_call.1} parent=1 // pred_fallthru
      _
    // Predicated region
    $region26: #{tpu_custom_call.1} parent=1 // pred_check
      _
    $region27: #{tpu_custom_call.1} parent=1 // pred_check_branch
      %60 = sbr.rel (0) target = $region29
    $region28: #{tpu_custom_call.1} parent=1 // pred_region
      %61 = dma.done [#allocation6], 2048
    $region29: #{tpu_custom_call.1} parent=1 // pred_fallthru
      _
    // Predicated region
    $region30: #{tpu_custom_call.1} parent=1 // pred_check
      _
    $region31: #{tpu_custom_call.1} parent=1 // pred_check_branch
      %63 = sbr.rel (0) target = $region33
    $region32: #{tpu_custom_call.1} parent=1 // pred_region
      %64 = dma.done [#allocation6], 2048
    $region33: #{tpu_custom_call.1} parent=1 // pred_fallthru
      _
    %v65 = vld [vmem:[#allocation2] sm:$0xff]
    %v66 = vld [vmem:[#allocation2 + $0x8] sm:$0xff]
    %v67 = vld [vmem:[#allocation2 + $0x10] sm:$0xff]
    %v68 = vld [vmem:[#allocation2 + $0x18] sm:$0xff]
    %v69 = vld [vmem:[#allocation2 + $0x20] sm:$0xff]
    %v70 = vld [vmem:[#allocation2 + $0x28] sm:$0xff]
    %v71 = vld [vmem:[#allocation2 + $0x30] sm:$0xff]
    %v72 = vld [vmem:[#allocation2 + $0x38] sm:$0xff]
    %v73 = vld [vmem:[#allocation5] sm:$0xff]
    %v74 = vld [vmem:[#allocation5 + $0x8] sm:$0xff]
    %v75 = vld [vmem:[#allocation5 + $0x10] sm:$0xff]
    %v76 = vld [vmem:[#allocation5 + $0x18] sm:$0xff]
    %v77 = vld [vmem:[#allocation5 + $0x20] sm:$0xff]
    %v78 = vld [vmem:[#allocation5 + $0x28] sm:$0xff]
    %v79 = vld [vmem:[#allocation5 + $0x30] sm:$0xff]
    %v80 = vld [vmem:[#allocation5 + $0x38] sm:$0xff]
    %v81 = vld [vmem:[#allocation5 + $0x40] sm:$0xff]
    %v82 = vld [vmem:[#allocation5 + $0x48] sm:$0xff]
    %v83 = vld [vmem:[#allocation5 + $0x50] sm:$0xff]
    %v84 = vld [vmem:[#allocation5 + $0x58] sm:$0xff]
    %v85 = vld [vmem:[#allocation5 + $0x60] sm:$0xff]
    %v86 = vld [vmem:[#allocation5 + $0x68] sm:$0xff]
    %v87 = vld [vmem:[#allocation5 + $0x70] sm:$0xff]
    %v88 = vld [vmem:[#allocation5 + $0x78] sm:$0xff]
    %v89 = vld [vmem:[%s2] sm:$0x1]
    %v91 = vlaneseq
    %v92 = vshrl.u32 %v91, 7
    %v93 = vsub.s32 0, %v92
    %v94 = vrot.slane %v89, %v93
    %96 = vmatprep.subr.mxu0 0.0
    %97 = vmatpush1.msra.mxu0 %v73
    %98 = vmatprep.subr.mxu0 0.0
    %99 = vmatpush1.msra.mxu0 %v74
    %100 = vmatprep.subr.mxu0 0.0
    %101 = vmatpush1.msra.mxu0 %v75
    %102 = vmatprep.subr.mxu0 0.0
    %103 = vmatpush1.msra.mxu0 %v76
    %104 = vmatprep.subr.mxu0 0.0
    %105 = vmatpush1.msra.mxu0 %v77
    %106 = vmatprep.subr.mxu0 0.0
    %107 = vmatpush1.msra.mxu0 %v78
    %108 = vmatprep.subr.mxu0 0.0
    %109 = vmatpush1.msra.mxu0 %v79
    %110 = vmatprep.subr.mxu0 0.0
    %111 = vmatpush1.msra.mxu0 %v80
    %112 = vmatprep.subr.mxu0 0.0
    %113 = vmatpush1.msra.mxu0 %v81
    %114 = vmatprep.subr.mxu0 0.0
    %115 = vmatpush1.msra.mxu0 %v82
    %116 = vmatprep.subr.mxu0 0.0
    %117 = vmatpush1.msra.mxu0 %v83
    %118 = vmatprep.subr.mxu0 0.0
    %119 = vmatpush1.msra.mxu0 %v84
    %120 = vmatprep.subr.mxu0 0.0
    %121 = vmatpush1.msra.mxu0 %v85
    %122 = vmatprep.subr.mxu0 0.0
    %123 = vmatpush1.msra.mxu0 %v86
    %124 = vmatprep.subr.mxu0 0.0
    %125 = vmatpush1.msra.mxu0 %v87
    %126 = vmatprep.subr.mxu0 0.0
    %127 = vmatpush1.msra.mxu0 %v88
    %128 = vmatprep.subr.mxu0 0.0
    %129 = vmatpush1.msra.mxu0 0.0
    %130 = vmatprep.subr.mxu0 0.0
    %131 = vmatpush1.msra.mxu0 0.0
    %132 = vmatprep.subr.mxu0 0.0
    %133 = vmatpush1.msra.mxu0 0.0
    %134 = vmatprep.subr.mxu0 0.0
    %135 = vmatpush1.msra.mxu0 0.0
    %136 = vmatprep.subr.mxu0 0.0
    %137 = vmatpush1.msra.mxu0 0.0
    %138 = vmatprep.subr.mxu0 0.0
    %139 = vmatpush1.msra.mxu0 0.0
    %140 = vmatprep.subr.mxu0 0.0
    %141 = vmatpush1.msra.mxu0 0.0
    %142 = vmatprep.subr.mxu0 0.0
    %143 = vmatpush1.msra.mxu0 0.0
    %144 = vmatprep.subr.mxu0 0.0
    %145 = vmatpush1.msra.mxu0 0.0
    %146 = vmatprep.subr.mxu0 0.0
    %147 = vmatpush1.msra.mxu0 0.0
    %148 = vmatprep.subr.mxu0 0.0
    %149 = vmatpush1.msra.mxu0 0.0
    %150 = vmatprep.subr.mxu0 0.0
    %151 = vmatpush1.msra.mxu0 0.0
    %152 = vmatprep.subr.mxu0 0.0
    %153 = vmatpush1.msra.mxu0 0.0
    %154 = vmatprep.subr.mxu0 0.0
    %155 = vmatpush1.msra.mxu0 0.0
    %156 = vmatprep.subr.mxu0 0.0
    %157 = vmatpush1.msra.mxu0 0.0
    %158 = vmatprep.subr.mxu0 0.0
    %159 = vmatpush1.msra.mxu0 0.0
    %160 = vmatprep.mubr.f32.mxu0 0.0
    %161 = vmatmul.mubr.f32.gmra.mrb[0].mxu0 %v65
    %v162 = vpop.f32.mrb[0].mxu0
    %v163 = vadd.f32 %v94, %v162
    %v164 = vpop.f32.mrb[0].mxu0
    %165 = vmatprep.mubr.f32.mxu0 0.0
    %166 = vmatmul.mubr.f32.gmra.mrb[0].mxu0 %v66
    %v167 = vpop.f32.mrb[0].mxu0
    %v168 = vadd.f32 %v94, %v167
    %v169 = vpop.f32.mrb[0].mxu0
    %170 = vmatprep.mubr.f32.mxu0 0.0
    %171 = vmatmul.mubr.f32.gmra.mrb[0].mxu0 %v67
    %v172 = vpop.f32.mrb[0].mxu0
    %v173 = vadd.f32 %v94, %v172
    %v174 = vpop.f32.mrb[0].mxu0
    %175 = vmatprep.mubr.f32.mxu0 0.0
    %176 = vmatmul.mubr.f32.gmra.mrb[0].mxu0 %v68
    %v177 = vpop.f32.mrb[0].mxu0
    %v178 = vadd.f32 %v94, %v177
    %v179 = vpop.f32.mrb[0].mxu0
    %180 = vmatprep.mubr.f32.mxu0 0.0
    %181 = vmatmul.mubr.f32.gmra.mrb[0].mxu0 %v69
    %v182 = vpop.f32.mrb[0].mxu0
    %v183 = vadd.f32 %v94, %v182
    %v184 = vpop.f32.mrb[0].mxu0
    %185 = vmatprep.mubr.f32.mxu0 0.0
    %186 = vmatmul.mubr.f32.gmra.mrb[0].mxu0 %v70
    %v187 = vpop.f32.mrb[0].mxu0
    %v188 = vadd.f32 %v94, %v187
    %v189 = vpop.f32.mrb[0].mxu0
    %190 = vmatprep.mubr.f32.mxu0 0.0
    %191 = vmatmul.mubr.f32.gmra.mrb[0].mxu0 %v71
    %v192 = vpop.f32.mrb[0].mxu0
    %v193 = vadd.f32 %v94, %v192
    %v194 = vpop.f32.mrb[0].mxu0
    %195 = vmatprep.mubr.f32.mxu0 0.0
    %196 = vmatmul.mubr.f32.gmra.mrb[0].mxu0 %v72
    %v197 = vpop.f32.mrb[0].mxu0
    %v198 = vadd.f32 %v94, %v197
    %v199 = vpop.f32.mrb[0].mxu0
    %200 = vdwg.mxu0
    %v201 = vmax.f32 %v163, 0.0
    %v202 = vmax.f32 %v168, 0.0
    %v203 = vmax.f32 %v173, 0.0
    %v204 = vmax.f32 %v178, 0.0
    %v205 = vmax.f32 %v183, 0.0
    %v206 = vmax.f32 %v188, 0.0
    %v207 = vmax.f32 %v193, 0.0
    %v208 = vmax.f32 %v198, 0.0
    %209 = vst [vmem:[#allocation8] sm:$0xff] %v201
    %210 = vst [vmem:[#allocation8 + $0x8] sm:$0xff] %v202
    %211 = vst [vmem:[#allocation8 + $0x10] sm:$0xff] %v203
    %212 = vst [vmem:[#allocation8 + $0x18] sm:$0xff] %v204
    %213 = vst [vmem:[#allocation8 + $0x20] sm:$0xff] %v205
    %214 = vst [vmem:[#allocation8 + $0x28] sm:$0xff] %v206
    %215 = vst [vmem:[#allocation8 + $0x30] sm:$0xff] %v207
    %216 = vst [vmem:[#allocation8 + $0x38] sm:$0xff] %v208
    %v217 = vld [vmem:[#allocation7] sm:$0xff]
    %v218 = vld [vmem:[#allocation7 + $0x8] sm:$0xff]
    %v219 = vld [vmem:[#allocation7 + $0x10] sm:$0xff]
    %v220 = vld [vmem:[#allocation7 + $0x18] sm:$0xff]
    %v221 = vld [vmem:[#allocation7 + $0x20] sm:$0xff]
    %v222 = vld [vmem:[#allocation7 + $0x28] sm:$0xff]
    %v223 = vld [vmem:[#allocation7 + $0x30] sm:$0xff]
    %v224 = vld [vmem:[#allocation7 + $0x38] sm:$0xff]
    %v225 = vld [vmem:[#allocation7 + $0x40] sm:$0xff]
    %v226 = vld [vmem:[#allocation7 + $0x48] sm:$0xff]
    %v227 = vld [vmem:[#allocation7 + $0x50] sm:$0xff]
    %v228 = vld [vmem:[#allocation7 + $0x58] sm:$0xff]
    %v229 = vld [vmem:[#allocation7 + $0x60] sm:$0xff]
    %v230 = vld [vmem:[#allocation7 + $0x68] sm:$0xff]
    %v231 = vld [vmem:[#allocation7 + $0x70] sm:$0xff]
    %v232 = vld [vmem:[#allocation7 + $0x78] sm:$0xff]
    %v233 = vld [vmem:[%s4] sm:$0x1]
    %v235 = vlaneseq
    %v236 = vshrl.u32 %v235, 7
    %v237 = vsub.s32 0, %v236
    %v238 = vrot.slane %v233, %v237
    %240 = vmatprep.subr.mxu0 0.0
    %241 = vmatpush1.msra.mxu0 %v217
    %242 = vmatprep.subr.mxu0 0.0
    %243 = vmatpush1.msra.mxu0 %v218
    %244 = vmatprep.subr.mxu0 0.0
    %245 = vmatpush1.msra.mxu0 %v219
    %246 = vmatprep.subr.mxu0 0.0
    %247 = vmatpush1.msra.mxu0 %v220
    %248 = vmatprep.subr.mxu0 0.0
    %249 = vmatpush1.msra.mxu0 %v221
    %250 = vmatprep.subr.mxu0 0.0
    %251 = vmatpush1.msra.mxu0 %v222
    %252 = vmatprep.subr.mxu0 0.0
    %253 = vmatpush1.msra.mxu0 %v223
    %254 = vmatprep.subr.mxu0 0.0
    %255 = vmatpush1.msra.mxu0 %v224
    %256 = vmatprep.subr.mxu0 0.0
    %257 = vmatpush1.msra.mxu0 %v225
    %258 = vmatprep.subr.mxu0 0.0
    %259 = vmatpush1.msra.mxu0 %v226
    %260 = vmatprep.subr.mxu0 0.0
    %261 = vmatpush1.msra.mxu0 %v227
    %262 = vmatprep.subr.mxu0 0.0
    %263 = vmatpush1.msra.mxu0 %v228
    %264 = vmatprep.subr.mxu0 0.0
    %265 = vmatpush1.msra.mxu0 %v229
    %266 = vmatprep.subr.mxu0 0.0
    %267 = vmatpush1.msra.mxu0 %v230
    %268 = vmatprep.subr.mxu0 0.0
    %269 = vmatpush1.msra.mxu0 %v231
    %270 = vmatprep.subr.mxu0 0.0
    %271 = vmatpush1.msra.mxu0 %v232
    %272 = vmatprep.subr.mxu0 0.0
    %273 = vmatpush1.msra.mxu0 0.0
    %274 = vmatprep.subr.mxu0 0.0
    %275 = vmatpush1.msra.mxu0 0.0
    %276 = vmatprep.subr.mxu0 0.0
    %277 = vmatpush1.msra.mxu0 0.0
    %278 = vmatprep.subr.mxu0 0.0
    %279 = vmatpush1.msra.mxu0 0.0
    %280 = vmatprep.subr.mxu0 0.0
    %281 = vmatpush1.msra.mxu0 0.0
    %282 = vmatprep.subr.mxu0 0.0
    %283 = vmatpush1.msra.mxu0 0.0
    %284 = vmatprep.subr.mxu0 0.0
    %285 = vmatpush1.msra.mxu0 0.0
    %286 = vmatprep.subr.mxu0 0.0
    %287 = vmatpush1.msra.mxu0 0.0
    %288 = vmatprep.subr.mxu0 0.0
    %289 = vmatpush1.msra.mxu0 0.0
    %290 = vmatprep.subr.mxu0 0.0
    %291 = vmatpush1.msra.mxu0 0.0
    %292 = vmatprep.subr.mxu0 0.0
    %293 = vmatpush1.msra.mxu0 0.0
    %294 = vmatprep.subr.mxu0 0.0
    %295 = vmatpush1.msra.mxu0 0.0
    %296 = vmatprep.subr.mxu0 0.0
    %297 = vmatpush1.msra.mxu0 0.0
    %298 = vmatprep.subr.mxu0 0.0
    %299 = vmatpush1.msra.mxu0 0.0
    %300 = vmatprep.subr.mxu0 0.0
    %301 = vmatpush1.msra.mxu0 0.0
    %302 = vmatprep.subr.mxu0 0.0
    %303 = vmatpush1.msra.mxu0 0.0
    %304 = vmatprep.mubr.f32.mxu0 0.0
    %305 = vmatmul.mubr.f32.gmra.mrb[0].mxu0 %v201
    %v306 = vpop.f32.mrb[0].mxu0
    %v307 = vadd.f32 %v238, %v306
    %v308 = vpop.f32.mrb[0].mxu0
    %309 = vmatprep.mubr.f32.mxu0 0.0
    %310 = vmatmul.mubr.f32.gmra.mrb[0].mxu0 %v202
    %v311 = vpop.f32.mrb[0].mxu0
    %v312 = vadd.f32 %v238, %v311
    %v313 = vpop.f32.mrb[0].mxu0
    %314 = vmatprep.mubr.f32.mxu0 0.0
    %315 = vmatmul.mubr.f32.gmra.mrb[0].mxu0 %v203
    %v316 = vpop.f32.mrb[0].mxu0
    %v317 = vadd.f32 %v238, %v316
    %v318 = vpop.f32.mrb[0].mxu0
    %319 = vmatprep.mubr.f32.mxu0 0.0
    %320 = vmatmul.mubr.f32.gmra.mrb[0].mxu0 %v204
    %v321 = vpop.f32.mrb[0].mxu0
    %v322 = vadd.f32 %v238, %v321
    %v323 = vpop.f32.mrb[0].mxu0
    %324 = vmatprep.mubr.f32.mxu0 0.0
    %325 = vmatmul.mubr.f32.gmra.mrb[0].mxu0 %v205
    %v326 = vpop.f32.mrb[0].mxu0
    %v327 = vadd.f32 %v238, %v326
    %v328 = vpop.f32.mrb[0].mxu0
    %329 = vmatprep.mubr.f32.mxu0 0.0
    %330 = vmatmul.mubr.f32.gmra.mrb[0].mxu0 %v206
    %v331 = vpop.f32.mrb[0].mxu0
    %v332 = vadd.f32 %v238, %v331
    %v333 = vpop.f32.mrb[0].mxu0
    %334 = vmatprep.mubr.f32.mxu0 0.0
    %335 = vmatmul.mubr.f32.gmra.mrb[0].mxu0 %v207
    %v336 = vpop.f32.mrb[0].mxu0
    %v337 = vadd.f32 %v238, %v336
    %v338 = vpop.f32.mrb[0].mxu0
    %339 = vmatprep.mubr.f32.mxu0 0.0
    %340 = vmatmul.mubr.f32.gmra.mrb[0].mxu0 %v208
    %v341 = vpop.f32.mrb[0].mxu0
    %v342 = vadd.f32 %v238, %v341
    %v343 = vpop.f32.mrb[0].mxu0
    %344 = vdwg.mxu0
    %345 = vst [vmem:[#allocation9] sm:$0xff] %v307
    %346 = vst [vmem:[#allocation9 + $0x8] sm:$0xff] %v312
    %347 = vst [vmem:[#allocation9 + $0x10] sm:$0xff] %v317
    %348 = vst [vmem:[#allocation9 + $0x18] sm:$0xff] %v322
    %349 = vst [vmem:[#allocation9 + $0x20] sm:$0xff] %v327
    %350 = vst [vmem:[#allocation9 + $0x28] sm:$0xff] %v332
    %351 = vst [vmem:[#allocation9 + $0x30] sm:$0xff] %v337
    %352 = vst [vmem:[#allocation9 + $0x38] sm:$0xff] %v342
    // Predicated region
    $region34: #{tpu_custom_call.1} parent=1 // pred_check
      _
    $region35: #{tpu_custom_call.1} parent=1 // pred_check_branch
      %354 = sbr.rel (0) target = $region37
    $region36: #{tpu_custom_call.1} parent=1 // pred_region
      %s356 = ssub.s32 1024, 1024
      %357 = vsyncadd [#allocation4], %s356
      %s358 = sshll.u32 [#allocation8], 4
      %s359 = int_to_ptr.vmem [resolvable:$true] %s358
      %364 = dma.vmem_to_hbm [thread:$0]  %s359, 1024, %s5, [#allocation4], 128, 128, 8
    $region37: #{tpu_custom_call.1} parent=1 // pred_fallthru
      _
    // Predicated region
    $region38: #{tpu_custom_call.1} parent=1 // pred_check
      _
    $region39: #{tpu_custom_call.1} parent=1 // pred_check_branch
      %366 = sbr.rel (0) target = $region41
    $region40: #{tpu_custom_call.1} parent=1 // pred_region
      %s368 = ssub.s32 1024, 1024
      %369 = vsyncadd [#allocation10], %s368
      %s370 = sshll.u32 [#allocation9], 4
      %s371 = int_to_ptr.vmem [resolvable:$true] %s370
      %376 = dma.vmem_to_hbm [thread:$0]  %s371, 1024, %s6, [#allocation10], 128, 128, 8
    $region41: #{tpu_custom_call.1} parent=1 // pred_fallthru
      _
    // Predicated region
    $region42: #{tpu_custom_call.1} parent=1 // pred_check
      _
    $region43: #{tpu_custom_call.1} parent=1 // pred_check_branch
      %378 = sbr.rel (0) target = $region45
    $region44: #{tpu_custom_call.1} parent=1 // pred_region
      %379 = dma.done [#allocation4], 1024
    $region45: #{tpu_custom_call.1} parent=1 // pred_fallthru
      _
    // Predicated region
    $region46: #{tpu_custom_call.1} parent=1 // pred_check
      _
    $region47: #{tpu_custom_call.1} parent=1 // pred_check_branch
      %381 = sbr.rel (0) target = $region49
    $region48: #{tpu_custom_call.1} parent=1 // pred_region
      %382 = dma.done [#allocation10], 1024
    $region49: #{tpu_custom_call.1} parent=1 // pred_fallthru
      _
    %383 = vsyncpa [#allocation3], 1
    %384 = vsyncpa [#allocation6], 1
    %385 = vsyncpa [#allocation4], 1
    %386 = vsyncpa [#allocation10], 1

</llo_original>
